<compile_context>
chip_gen: v7x
topology: tpu7x:2x2x1
jax: 0.10.0
libtpu: 0.0.40
codegen_flags: <defaults>
</compile_context>

<pallas_src>
import jax
import jax.numpy as jnp
from jax import lax
from jax.experimental import pallas as pl
from jax.experimental.pallas import tpu as pltpu

TAU = 0.1
_EPS = 1e-12                               # guards rsqrt on an all-zero row
_VMEM_BUDGET = 40 * 1024 * 1024            # tile-picking budget (v7x has 64 MiB VMEM)
_VMEM_LIMIT_BYTES = 50 * 1024 * 1024       # scoped-VMEM limit handed to Mosaic


def _infonce_kernel(cap_ref, img_ref, rowsum_ref, diag_ref, colpart_ref):
    """One (caption row-tile i, image column-tile j) step.

    cap_ref:  (B, D)   normalized captions * (1/tau), bf16 (or f32)
    img_ref:  (B, D)   normalized images, bf16 (or f32)
    rowsum_ref:  (B, 1)   t2i denominators, accumulated over j (resident)
    diag_ref:    (B, 1)   diagonal logits s_ii, written on the i == j tile
    colpart_ref: (8, B)   partial i2t denominators for this (i, j) tile
    """
    i = pl.program_id(0)
    j = pl.program_id(1)

    # MXU matmul: contract over D on both operands (no explicit transpose),
    # operands already in the MXU feed dtype (bf16), f32 accumulation.
    s = lax.dot_general(
        cap_ref[...], img_ref[...],
        dimension_numbers=(((1,), (1,)), ((), ())),
        preferred_element_type=jnp.float32)                      # (B, B) logits (already / tau)

    # |logits| <= 1/tau (cosine is bounded), so a single exp pass with no max
    # subtraction is safe and feeds BOTH the row and column denominators.
    # TODO(synk): an EUP-bound config on v6e/v7x could use a bf16 exp here.
    p = jnp.exp(s)

    b = s.shape[0]

    @pl.when(j == 0)
    def _init():
        rowsum_ref[...] = jnp.zeros_like(rowsum_ref)
        diag_ref[...] = jnp.zeros_like(diag_ref)

    # t2i denominators: per-caption row exp-sums, accumulated over image tiles.
    rowsum_ref[...] += jnp.sum(p, axis=1, keepdims=True)         # (B, 1)

    # i2t denominators: per-image partial column exp-sums for this tile, kept
    # as an (8, B) sublane-aligned slab -> pure VALU slab adds, unmasked
    # lane-dense stores; the final 8 -> 1 collapse happens in the epilogue.
    colpart_ref[...] = p.reshape(b // 8, 8, b).sum(axis=0)       # (8, B)

    # Positive-pair logits: extract diag(s) on aligned tiles so the numerator
    # is exactly consistent with the denominators (same bf16-fed s tile).
    @pl.when(i == j)
    def _diag():
        r = lax.broadcasted_iota(jnp.int32, (b, b), 0)
        c = lax.broadcasted_iota(jnp.int32, (b, b), 1)
        diag_ref[...] = jnp.sum(jnp.where(r == c, s, 0.0), axis=1, keepdims=True)


def _vmem_estimate(block, d, in_bytes):
    inputs = 2 * 2 * block * d * in_bytes          # 2 double-buffered input tiles
    temps = 3 * block * block * 4                  # s, p, reduction temporaries (f32)
    outs = 2 * 2 * block * 128 * 4 + 2 * 8 * block * 4
    return inputs + temps + outs


def _pick_block(n, d, in_bytes):
    cands = {1024, 512, 256, 128, 64, 32, 16}
    if n % 8 == 0:
        cands.add(n)                               # single full tile (if it fits)
    for t in sorted(cands, reverse=True):
        if (t <= n and n % t == 0 and (t % 16 == 0 or t == n)
                and _vmem_estimate(t, d, in_bytes) <= _VMEM_BUDGET):
            return t
    raise ValueError(f"no valid tile size for N={n}, D={d}")


def infonce_loss(images, captions, *, tau=TAU, block=None, mxu_dtype=jnp.bfloat16):
    """images, captions: (N, D). Returns scalar float32 InfoNCE loss."""
    n, d = images.shape
    assert captions.shape == (n, d)
    if 1.0 / tau > 60.0:
        # exp without max-subtraction relies on |logits| <= 1/tau being small.
        raise ValueError("tau too small for the no-max-subtraction fast path")
    if n % 8 != 0:
        # TODO(synk): pad N to a multiple of 8 and mask instead of raising.
        raise ValueError(f"N={n} must be a multiple of 8")

    in_bytes = jnp.dtype(mxu_dtype).itemsize
    if block is None:
        block = _pick_block(n, d, in_bytes)
    sub = 16 if in_bytes == 2 else 8
    if n % block != 0 or not (block % sub == 0 or block == n):
        raise ValueError(f"invalid block {block} for N={n}, dtype={mxu_dtype}")
    ni = nj = n // block

    # ---- O(N*D) prologue (plain JAX, runs once): normalize, fold 1/tau into
    # the caption side, downcast to the MXU feed dtype. ----
    imgs = images.astype(jnp.float32)
    caps = captions.astype(jnp.float32)
    img_n = (imgs * lax.rsqrt(jnp.sum(imgs * imgs, -1, keepdims=True) + _EPS)
             ).astype(mxu_dtype)
    cap_n = (caps * (lax.rsqrt(jnp.sum(caps * caps, -1, keepdims=True) + _EPS)
                     * (1.0 / tau))).astype(mxu_dtype)

    rowsum, diag, colpart = pl.pallas_call(
        _infonce_kernel,
        out_shape=(
            jax.ShapeDtypeStruct((ni, block, 1), jnp.float32),       # row exp-sums
            jax.ShapeDtypeStruct((ni, block, 1), jnp.float32),       # diagonal logits
            jax.ShapeDtypeStruct((ni, nj, 8, block), jnp.float32),   # col exp-sum partials
        ),
        grid_spec=pltpu.PrefetchScalarGridSpec(
            num_scalar_prefetch=0,
            grid=(ni, nj),
            in_specs=[
                # TODO(synk): pl.Buffered(1) on the caption spec would trim one
                # VMEM buffer (its block index is invariant over the inner j loop).
                pl.BlockSpec((block, d), lambda i, j: (i, 0)),   # captions (rows)
                pl.BlockSpec((block, d), lambda i, j: (j, 0)),   # images (cols)
            ],
            out_specs=[
                pl.BlockSpec((None, block, 1), lambda i, j: (i, 0, 0)),
                pl.BlockSpec((None, block, 1), lambda i, j: (i, 0, 0)),
                pl.BlockSpec((None, None, 8, block), lambda i, j: (i, j, 0, 0)),
            ],
        ),
        compiler_params=pltpu.CompilerParams(
            # Row-tile axis is independent across outputs -> megacore-shardable
            # (v7x has 2 TensorCores).  The inner j axis carries the row-sum
            # accumulation, so it stays "arbitrary".
            dimension_semantics=("parallel", "arbitrary"),
            vmem_limit_bytes=_VMEM_LIMIT_BYTES,
        ),
    )(cap_n, img_n)

    # ---- tiny O(N) epilogue in JAX ----
    rowsum = rowsum.reshape(n)                       # t2i denominators
    diag = diag.reshape(n)                           # positive-pair logits
    colsum = colpart.sum(axis=(0, 2)).reshape(n)     # i2t denominators
    # 0.5 * image_retrieval_loss + 0.5 * caption_retrieval_loss
    return jnp.mean(0.5 * (jnp.log(rowsum) + jnp.log(colsum)) - diag)


# ------------------------- references for validation -------------------------

def _reference(images, captions, tau=TAU):
    """Exact f32 port of the PyTorch module."""
    def norm(x):
        return x / jnp.linalg.norm(x, axis=-1, keepdims=True)
    cap_n, img_n = norm(captions), norm(images)
    t2i = jnp.dot(cap_n, img_n.T, precision=lax.Precision.HIGHEST) / tau
    i2t = t2i.T
    ls = jax.nn.log_softmax
    image_loss = -jnp.mean(jnp.diag(ls(t2i, axis=1)))
    caption_loss = -jnp.mean(jnp.diag(ls(i2t, axis=1)))
    return 0.5 * caption_loss + 0.5 * image_loss


def _reference_bf16_matched(images, captions, tau=TAU):
    """Reference with the same bf16 operand quantization the kernel feeds the MXU."""
    imgs = images.astype(jnp.float32)
    caps = captions.astype(jnp.float32)
    img_n = (imgs * lax.rsqrt(jnp.sum(imgs * imgs, -1, keepdims=True) + _EPS)
             ).astype(jnp.bfloat16).astype(jnp.float32)
    cap_n = (caps * (lax.rsqrt(jnp.sum(caps * caps, -1, keepdims=True) + _EPS)
                     * (1.0 / tau))).astype(jnp.bfloat16).astype(jnp.float32)
    s = jnp.dot(cap_n, img_n.T, precision=lax.Precision.HIGHEST)
    p = jnp.exp(s)
    return jnp.mean(0.5 * (jnp.log(p.sum(axis=1)) + jnp.log(p.sum(axis=0)))
                    - jnp.diag(s))


if __name__ == "__main__":
    key = jax.random.PRNGKey(0)
    k1, k2 = jax.random.split(key)
    N, D = 128, 128
    images = jax.random.normal(k1, (N, D), dtype=jnp.float32)
    captions = jax.random.normal(k2, (N, D), dtype=jnp.float32)

    loss_tiled = infonce_loss(images, captions, block=64)   # 2x2 tile grid
    loss_auto = infonce_loss(images, captions)              # auto tile (1x1 here)
    jax.block_until_ready((loss_tiled, loss_auto))

    ref_f32 = _reference(images, captions)
    ref_bf16 = _reference_bf16_matched(images, captions)

    # Tight check against the bf16-operand-matched reference (validates the
    # tiling / online accumulation / diagonal logic essentially exactly).
    assert jnp.allclose(loss_tiled, ref_bf16, rtol=1e-4, atol=1e-4), (loss_tiled, ref_bf16)
    assert jnp.allclose(loss_auto, ref_bf16, rtol=1e-4, atol=1e-4), (loss_auto, ref_bf16)
    # Loose check against the exact f32 PyTorch-equivalent reference (bf16 MXU
    # feeds introduce a small, documented quantization error).
    assert jnp.allclose(loss_tiled, ref_f32, rtol=1e-2, atol=2e-2), (loss_tiled, ref_f32)
    assert jnp.allclose(loss_auto, ref_f32, rtol=1e-2, atol=2e-2), (loss_auto, ref_f32)
    print("KERNEL_OK")
</pallas_src>

<mosaic_0001>
module attributes {stable_mosaic.version = 11 : i64} {
  func.func @_infonce_kernel(%arg0: i32, %arg1: i32, %arg2: memref<64x128xbf16, #tpu.memory_space<vmem>>, %arg3: memref<64x128xbf16, #tpu.memory_space<vmem>>, %arg4: memref<1x64x1xf32, #tpu.memory_space<vmem>>, %arg5: memref<1x64x1xf32, #tpu.memory_space<vmem>>, %arg6: memref<1x1x8x64xf32, #tpu.memory_space<vmem>>) attributes {dimension_semantics = [#tpu.dimension_semantics<parallel>, #tpu.dimension_semantics<arbitrary>], iteration_bounds = array<i64: 2, 2>, scalar_prefetch = 0 : i64, scratch_operands = 0 : i64, tpu.core_type = #tpu.core_type<tc>, window_params = [{transform_indices = @transform_0, window_bounds = array<i64: 64, 128>}, {transform_indices = @transform_1, window_bounds = array<i64: 64, 128>}, {transform_indices = @transform_2, window_bounds = array<i64: 1, 64, 1>}, {transform_indices = @transform_3, window_bounds = array<i64: 1, 64, 1>}, {transform_indices = @transform_4, window_bounds = array<i64: 1, 1, 8, 64>}]} {
    %c0 = arith.constant 0 : index
    %c0_0 = arith.constant 0 : index
    %0 = vector.load %arg2[%c0, %c0_0] : memref<64x128xbf16, #tpu.memory_space<vmem>>, vector<64x128xbf16>
    %c0_1 = arith.constant 0 : index
    %c0_2 = arith.constant 0 : index
    %1 = vector.load %arg3[%c0_1, %c0_2] : memref<64x128xbf16, #tpu.memory_space<vmem>>, vector<64x128xbf16>
    %cst = arith.constant dense<0.000000e+00> : vector<64x64xf32>
    %2 = tpu.matmul %0, %1, %cst {dimension_numbers = #tpu.dot_dimension_numbers<[1], [1], [0], [0], [0, 0, 1, 0], [], []>} : vector<64x128xbf16>, vector<64x128xbf16>, vector<64x64xf32> -> vector<64x64xf32>
    %3 = math.exp %2 : vector<64x64xf32>
    %c0_i32 = arith.constant 0 : i32
    %4 = arith.cmpi eq, %arg1, %c0_i32 : i32
    %5 = arith.extui %4 : i1 to i32
    %c0_i32_3 = arith.constant 0 : i32
    %6 = arith.cmpi ne, %5, %c0_i32_3 : i32
    scf.if %6 {
      %cst_17 = arith.constant 0.000000e+00 : f32
      %23 = vector.broadcast %cst_17 : f32 to vector<64x1xf32>
      %c0_18 = arith.constant 0 : index
      %c0_19 = arith.constant 0 : index
      %c0_20 = arith.constant 0 : index
      %24 = vector.load %arg4[%c0_18, %c0_19, %c0_20] : memref<1x64x1xf32, #tpu.memory_space<vmem>>, vector<1x64x1xf32>
      %25 = vector.shape_cast %24 : vector<1x64x1xf32> to vector<64x1xf32>
      %26 = vector.shape_cast %23 : vector<64x1xf32> to vector<1x64x1xf32>
      tpu.vector_store %arg4[%c0_18, %c0_19, %c0_20], %26 {strides = array<i32>} : memref<1x64x1xf32, #tpu.memory_space<vmem>>, vector<1x64x1xf32>,
      %cst_21 = arith.constant 0.000000e+00 : f32
      %27 = vector.broadcast %cst_21 : f32 to vector<64x1xf32>
      %c0_22 = arith.constant 0 : index
      %c0_23 = arith.constant 0 : index
      %c0_24 = arith.constant 0 : index
      %28 = vector.load %arg5[%c0_22, %c0_23, %c0_24] : memref<1x64x1xf32, #tpu.memory_space<vmem>>, vector<1x64x1xf32>
      %29 = vector.shape_cast %28 : vector<1x64x1xf32> to vector<64x1xf32>
      %30 = vector.shape_cast %27 : vector<64x1xf32> to vector<1x64x1xf32>
      tpu.vector_store %arg5[%c0_22, %c0_23, %c0_24], %30 {strides = array<i32>} : memref<1x64x1xf32, #tpu.memory_space<vmem>>, vector<1x64x1xf32>,
    } else {
    }
    %c0_4 = arith.constant 0 : index
    %c0_5 = arith.constant 0 : index
    %c0_6 = arith.constant 0 : index
    %7 = vector.load %arg4[%c0_4, %c0_5, %c0_6] : memref<1x64x1xf32, #tpu.memory_space<vmem>>, vector<1x64x1xf32>
    %8 = vector.shape_cast %7 : vector<1x64x1xf32> to vector<64x1xf32>
    %cst_7 = arith.constant dense<0.000000e+00> : vector<64xf32>
    %9 = vector.multi_reduction <add>, %3, %cst_7 [1] : vector<64x64xf32> to vector<64xf32>
    %10 = vector.shape_cast %9 : vector<64xf32> to vector<64x1xf32>
    %11 = arith.addf %8, %10 : vector<64x1xf32>
    %c0_8 = arith.constant 0 : index
    %c0_9 = arith.constant 0 : index
    %c0_10 = arith.constant 0 : index
    %12 = vector.load %arg4[%c0_8, %c0_9, %c0_10] : memref<1x64x1xf32, #tpu.memory_space<vmem>>, vector<1x64x1xf32>
    %13 = vector.shape_cast %12 : vector<1x64x1xf32> to vector<64x1xf32>
    %14 = vector.shape_cast %11 : vector<64x1xf32> to vector<1x64x1xf32>
    tpu.vector_store %arg4[%c0_8, %c0_9, %c0_10], %14 {strides = array<i32>} : memref<1x64x1xf32, #tpu.memory_space<vmem>>, vector<1x64x1xf32>,
    %15 = vector.shape_cast %3 : vector<64x64xf32> to vector<8x8x64xf32>
    %cst_11 = arith.constant dense<0.000000e+00> : vector<8x64xf32>
    %16 = vector.multi_reduction <add>, %15, %cst_11 [0] : vector<8x8x64xf32> to vector<8x64xf32>
    %c0_12 = arith.constant 0 : index
    %c0_13 = arith.constant 0 : index
    %c0_14 = arith.constant 0 : index
    %c0_15 = arith.constant 0 : index
    %17 = vector.load %arg6[%c0_12, %c0_13, %c0_14, %c0_15] : memref<1x1x8x64xf32, #tpu.memory_space<vmem>>, vector<1x1x8x64xf32>
    %18 = vector.shape_cast %17 : vector<1x1x8x64xf32> to vector<8x64xf32>
    %19 = vector.shape_cast %16 : vector<8x64xf32> to vector<1x1x8x64xf32>
    tpu.vector_store %arg6[%c0_12, %c0_13, %c0_14, %c0_15], %19 {strides = array<i32>} : memref<1x1x8x64xf32, #tpu.memory_space<vmem>>, vector<1x1x8x64xf32>,
    %20 = arith.cmpi eq, %arg0, %arg1 : i32
    %21 = arith.extui %20 : i1 to i32
    %c0_i32_16 = arith.constant 0 : i32
    %22 = arith.cmpi ne, %21, %c0_i32_16 : i32
    scf.if %22 {
      %23 = tpu.iota {dimensions = array<i32: 0>} : vector<64x64xi32>
      %24 = tpu.iota {dimensions = array<i32: 1>} : vector<64x64xi32>
      %25 = arith.cmpi eq, %23, %24 : vector<64x64xi32>
      %cst_17 = arith.constant 0.000000e+00 : f32
      %26 = vector.broadcast %cst_17 : f32 to vector<64x64xf32>
      %27 = arith.select %25, %2, %26 : vector<64x64xi1>, vector<64x64xf32>
      %cst_18 = arith.constant dense<0.000000e+00> : vector<64xf32>
      %28 = vector.multi_reduction <add>, %27, %cst_18 [1] : vector<64x64xf32> to vector<64xf32>
      %29 = vector.shape_cast %28 : vector<64xf32> to vector<64x1xf32>
      %c0_19 = arith.constant 0 : index
      %c0_20 = arith.constant 0 : index
      %c0_21 = arith.constant 0 : index
      %30 = vector.load %arg5[%c0_19, %c0_20, %c0_21] : memref<1x64x1xf32, #tpu.memory_space<vmem>>, vector<1x64x1xf32>
      %31 = vector.shape_cast %30 : vector<1x64x1xf32> to vector<64x1xf32>
      %32 = vector.shape_cast %29 : vector<64x1xf32> to vector<1x64x1xf32>
      tpu.vector_store %arg5[%c0_19, %c0_20, %c0_21], %32 {strides = array<i32>} : memref<1x64x1xf32, #tpu.memory_space<vmem>>, vector<1x64x1xf32>,
    } else {
    }
    return
  }
  func.func @transform_0(%arg0: i32, %arg1: i32) -> (i32, i32) {
    %c0_i32 = arith.constant 0 : i32
    %c0_i32_0 = arith.constant 0 : i32
    return %arg0, %c0_i32 : i32, i32
  }
  func.func @transform_1(%arg0: i32, %arg1: i32) -> (i32, i32) {
    %c0_i32 = arith.constant 0 : i32
    %c0_i32_0 = arith.constant 0 : i32
    return %arg1, %c0_i32 : i32, i32
  }
  func.func @transform_2(%arg0: i32, %arg1: i32) -> (i32, i32, i32) {
    %c0_i32 = arith.constant 0 : i32
    %c0_i32_0 = arith.constant 0 : i32
    %c0_i32_1 = arith.constant 0 : i32
    return %arg0, %c0_i32, %c0_i32_0 : i32, i32, i32
  }
  func.func @transform_3(%arg0: i32, %arg1: i32) -> (i32, i32, i32) {
    %c0_i32 = arith.constant 0 : i32
    %c0_i32_0 = arith.constant 0 : i32
    %c0_i32_1 = arith.constant 0 : i32
    return %arg0, %c0_i32, %c0_i32_0 : i32, i32, i32
  }
  func.func @transform_4(%arg0: i32, %arg1: i32) -> (i32, i32, i32, i32) {
    %c0_i32 = arith.constant 0 : i32
    %c0_i32_0 = arith.constant 0 : i32
    %c0_i32_1 = arith.constant 0 : i32
    return %arg0, %arg1, %c0_i32, %c0_i32_0 : i32, i32, i32, i32
  }
}

</mosaic_0001>

<llo_original>
// kernel: tpu_custom_call.1
$region0: #{tpu_custom_call.1}
  #allocation0 [shape = 'u32[]', space=smem, size = 0x4, offset = 0x4, fixed_abs, tag = 'smem constant byte address 0x4 - core index']
  #allocation1 [shape = 'u32[144,128]{1,0:T(1,128)}', space=vmem, size = 0x12000, scoped, tag = 'internal scratch']
  %s0 = inlined_call_operand.hbm [shape: bf16[128,128], index: 0, kind: input, shape index: {}]
  %s1 = inlined_call_operand.hbm [shape: bf16[128,128], index: 1, kind: input, shape index: {}]
  %s2 = inlined_call_operand.vmem [shape: f32[2,64,1], index: 2, kind: output, shape index: {0}]
  %s3 = inlined_call_operand.vmem [shape: f32[2,64,1], index: 3, kind: output, shape index: {1}]
  %s4 = inlined_call_operand.hbm [shape: f32[2,2,8,64], index: 4, kind: output, shape index: {2}]
  %5 = xla_tuple %s2, %s3, %s4
  %s6 = sld [smem:[#allocation0]]
  $region73: #{tpu_custom_call.1} parent=0
    _
  %s8 = ssub.s32 1, %s6
  %s9 = scalar_select 0, %s8, %s6
  $region1: #{tpu_custom_call.1} parent=0
    #allocation2 [shape = 'u8[32768]{0}', space=vmem, size = 0x8000, scoped, tag = 'input window, operand 0']
    #allocation3 [shape = 's32[2]{0}', space=sflag, size = 0x8, scoped, tag = 'scoped memory for tpu_custom_call.1']
    #allocation4 [shape = 's32[2]{0}', space=sflag, size = 0x8, scoped, tag = 'scoped memory for tpu_custom_call.1']
    #allocation5 [shape = 'u8[32768]{0}', space=vmem, size = 0x8000, scoped, tag = 'input window, operand 1']
    #allocation6 [shape = 's32[2]{0}', space=sflag, size = 0x8, scoped, tag = 'scoped memory for tpu_custom_call.1']
    #allocation7 [shape = 'u8[8192]{0}', space=vmem, size = 0x2000, scoped, tag = 'output window, operand 2']
    %10 = vsyncpa [#allocation3], 0
    %s11 = scalar_lea.sflag [#allocation3], 1
    %12 = vsyncpa %s11, 0
    %13 = vsyncpa [#allocation6], 0
    %s14 = scalar_lea.sflag [#allocation6], 1
    %15 = vsyncpa %s14, 0
    %16 = vsyncpa [#allocation4], 0
    %s17 = scalar_lea.sflag [#allocation4], 1
    %18 = vsyncpa %s17, 0
    loop: start=0, step=1, limit=6
    $region2: #{tpu_custom_call.1} parent=1 // loop_pre_header
      _
    $region3: #{tpu_custom_call.1} parent=1 // loop_header
      %s20 = sphi 0, %s24
      %p21 = scmp.ge.s32.totalorder %s20, 6
      %s27 = sphi 0, %s39
      %s28 = sphi 0, %s35
      %s29 = sphi 0, %s27
      %s30 = sphi 0, %s28
      %s31 = sphi 0, %s29
      %s32 = sphi 0, %s30
      %s42 = sphi 0, %s44
      %s45 = sphi 0, %s42
      %s46 = sphi 0, %s45
      %s62 = sphi 0, %s46
      %s68 = sphi 0, %s70
      %s71 = sphi 0, %s68
      %s72 = sphi 0, %s71
      %s88 = sphi 0, %s72
      %s94 = sphi 0, %s96
      %s97 = sphi 0, %s94
      %s98 = sphi 0, %s97
      %s114 = sphi 0, %s98
      %s120 = sphi 0, %s122
      %s123 = sphi 0, %s120
      %s124 = sphi 0, %s123
      %s140 = sphi 0, %s124
      %s148 = sphi 0, %s150
      %s151 = sphi 0, %s148
      %s152 = sphi 0, %s151
      %s168 = sphi 0, %s152
    $region4: #{tpu_custom_call.1} parent=1 // loop_header_branch
      %23 = sbr.rel (%p21) target = $region8
    $region5: #{tpu_custom_call.1} parent=1 // loop_body
      %s25 = ssub.s32 %s20, 1
      %s26 = ssub.s32 %s20, 2
      %s33 = sadd.s32 1, %s28
      %p34 = scmp.ge.s32.totalorder %s33, 2
      %s35 = scalar_select %p34, 0, %s33
      %s36 = sadd.s32 1, %s27
      %s37 = scalar_select %p34, %s36, %s27
      %p38 = scmp.ge.s32.totalorder %s37, 2
      %s39 = scalar_select %p38, 0, %s37
      %s40 = ssub.s32 %s27, %s39
      %p41 = scmp.eq.s32.totalorder %s40, 0
      %s43 = sadd.s32 %s42, 1
      %s44 = scalar_select %p41, %s42, %s43
      %p47 = pneg %p41
      %p48 = scmp.eq.s32.totalorder %s20, 3
      %p49 = por %p47, %p48
      %p50 = scmp.ne.s32.totalorder %s42, %s45
      %p51 = scmp.eq.s32.totalorder %s20, 0
      %p52 = por %p50, %p51
      %p53 = scmp.ne.s32.totalorder %s42, %s45
      %p54 = scmp.eq.s32.totalorder %s25, 3
      %p55 = por %p53, %p54
      %p56 = scmp.ne.s32.totalorder %s45, %s46
      %p57 = scmp.eq.s32.totalorder %s25, 0
      %p58 = por %p56, %p57
      %p59 = scmp.ne.s32.totalorder %s45, %s46
      %p60 = scmp.eq.s32.totalorder %s26, 3
      %p61 = por %p59, %p60
      %p63 = scmp.ne.s32.totalorder %s46, %s62
      %p64 = scmp.eq.s32.totalorder %s26, 0
      %p65 = por %p63, %p64
      %s66 = ssub.s32 %s28, %s35
      %p67 = scmp.eq.s32.totalorder %s66, 0
      %s69 = sadd.s32 %s68, 1
      %s70 = scalar_select %p67, %s68, %s69
      %p73 = pneg %p67
      %p74 = scmp.eq.s32.totalorder %s20, 3
      %p75 = por %p73, %p74
      %p76 = scmp.ne.s32.totalorder %s68, %s71
      %p77 = scmp.eq.s32.totalorder %s20, 0
      %p78 = por %p76, %p77
      %p79 = scmp.ne.s32.totalorder %s68, %s71
      %p80 = scmp.eq.s32.totalorder %s25, 3
      %p81 = por %p79, %p80
      %p82 = scmp.ne.s32.totalorder %s71, %s72
      %p83 = scmp.eq.s32.totalorder %s25, 0
      %p84 = por %p82, %p83
      %p85 = scmp.ne.s32.totalorder %s71, %s72
      %p86 = scmp.eq.s32.totalorder %s26, 3
      %p87 = por %p85, %p86
      %p89 = scmp.ne.s32.totalorder %s72, %s88
      %p90 = scmp.eq.s32.totalorder %s26, 0
      %p91 = por %p89, %p90
      %s92 = ssub.s32 %s27, %s39
      %p93 = scmp.eq.s32.totalorder %s92, 0
      %s95 = sadd.s32 %s94, 1
      %s96 = scalar_select %p93, %s94, %s95
      %p99 = pneg %p93
      %p100 = scmp.eq.s32.totalorder %s20, 3
      %p101 = por %p99, %p100
      %p102 = scmp.ne.s32.totalorder %s94, %s97
      %p103 = scmp.eq.s32.totalorder %s20, 0
      %p104 = por %p102, %p103
      %p105 = scmp.ne.s32.totalorder %s94, %s97
      %p106 = scmp.eq.s32.totalorder %s25, 3
      %p107 = por %p105, %p106
      %p108 = scmp.ne.s32.totalorder %s97, %s98
      %p109 = scmp.eq.s32.totalorder %s25, 0
      %p110 = por %p108, %p109
      %p111 = scmp.ne.s32.totalorder %s97, %s98
      %p112 = scmp.eq.s32.totalorder %s26, 3
      %p113 = por %p111, %p112
      %p115 = scmp.ne.s32.totalorder %s98, %s114
      %p116 = scmp.eq.s32.totalorder %s26, 0
      %p117 = por %p115, %p116
      %s118 = ssub.s32 %s27, %s39
      %p119 = scmp.eq.s32.totalorder %s118, 0
      %s121 = sadd.s32 %s120, 1
      %s122 = scalar_select %p119, %s120, %s121
      %p125 = pneg %p119
      %p126 = scmp.eq.s32.totalorder %s20, 3
      %p127 = por %p125, %p126
      %p128 = scmp.ne.s32.totalorder %s120, %s123
      %p129 = scmp.eq.s32.totalorder %s20, 0
      %p130 = por %p128, %p129
      %p131 = scmp.ne.s32.totalorder %s120, %s123
      %p132 = scmp.eq.s32.totalorder %s25, 3
      %p133 = por %p131, %p132
      %p134 = scmp.ne.s32.totalorder %s123, %s124
      %p135 = scmp.eq.s32.totalorder %s25, 0
      %p136 = por %p134, %p135
      %p137 = scmp.ne.s32.totalorder %s123, %s124
      %p138 = scmp.eq.s32.totalorder %s26, 3
      %p139 = por %p137, %p138
      %p141 = scmp.ne.s32.totalorder %s124, %s140
      %p142 = scmp.eq.s32.totalorder %s26, 0
      %p143 = por %p141, %p142
      %s144 = ssub.s32 %s27, %s39
      %s145 = ssub.s32 %s28, %s35
      %s146 = sor.u32 %s144, %s145
      %p147 = scmp.eq.s32.totalorder %s146, 0
      %s149 = sadd.s32 %s148, 1
      %s150 = scalar_select %p147, %s148, %s149
      %p153 = pneg %p147
      %p154 = scmp.eq.s32.totalorder %s20, 3
      %p155 = por %p153, %p154
      %p156 = scmp.ne.s32.totalorder %s148, %s151
      %p157 = scmp.eq.s32.totalorder %s20, 0
      %p158 = por %p156, %p157
      %p159 = scmp.ne.s32.totalorder %s148, %s151
      %p160 = scmp.eq.s32.totalorder %s25, 3
      %p161 = por %p159, %p160
      %p162 = scmp.ne.s32.totalorder %s151, %s152
      %p163 = scmp.eq.s32.totalorder %s25, 0
      %p164 = por %p162, %p163
      %p165 = scmp.ne.s32.totalorder %s151, %s152
      %p166 = scmp.eq.s32.totalorder %s26, 3
      %p167 = por %p165, %p166
      %p169 = scmp.ne.s32.totalorder %s152, %s168
      %p170 = scmp.eq.s32.totalorder %s26, 0
      %p171 = por %p169, %p170
      %p172 = scmp.le.s32.totalorder 1, %s20
      %p173 = scmp.lt.s32.totalorder %s20, 5
      %p174 = pnand %p172, %p173
      %p175 = pneg %p174
      // Predicated region
      $region9: #{tpu_custom_call.1} parent=5 // pred_check
        _
      $region10: #{tpu_custom_call.1} parent=5 // pred_check_branch
        %177 = sbr.rel (%p174) target = $region12
      $region11: #{tpu_custom_call.1} parent=5 // pred_region
        %s178 = ssub.s32 %s20, 1
      $region12: #{tpu_custom_call.1} parent=5 // pred_fallthru
        _
      %p179 = scmp.lt.s32.totalorder %s20, 4
      // Predicated region
      $region13: #{tpu_custom_call.1} parent=5 // pred_check
        %p180 = pneg %p179
      $region14: #{tpu_custom_call.1} parent=5 // pred_check_branch
        %182 = sbr.rel (%p180) target = $region16
      $region15: #{tpu_custom_call.1} parent=5 // pred_region
        // Predicated region
        $region17: #{tpu_custom_call.1} parent=15 // pred_check
          %p183 = pneg %p52
        $region18: #{tpu_custom_call.1} parent=15 // pred_check_branch
          %185 = sbr.rel (%p183) target = $region20
        $region19: #{tpu_custom_call.1} parent=15 // pred_region
          %s186 = sand.u32 %s42, 1
          %s187 = scalar_lea.sflag [#allocation3], %s186
          %s188 = sand.u32 %s42, 1
          %s189 = smul.addr %s188, 32
          %s190 = scalar_lea.vmem [#allocation2], %s189
          %s191 = smul.u32 8, %s27
          %s193 = ssub.s32 512, 512
          %194 = vsyncadd %s187, %s193
          %s195 = smul.addr %s191, 64
          %s196 = scalar_lea.hbm %s0, %s195
          %s197 = sshll.u32 %s190, 4
          %s198 = int_to_ptr.vmem [resolvable:$true] %s197
          %203 = dma.hbm_to_vmem [thread:$0]  %s196, 512, %s198, %s187, 64, 64, 4
        $region20: #{tpu_custom_call.1} parent=15 // pred_fallthru
          _
        // Predicated region
        $region21: #{tpu_custom_call.1} parent=15 // pred_check
          %p204 = pneg %p78
        $region22: #{tpu_custom_call.1} parent=15 // pred_check_branch
          %206 = sbr.rel (%p204) target = $region24
        $region23: #{tpu_custom_call.1} parent=15 // pred_region
          %s207 = sand.u32 %s68, 1
          %s208 = scalar_lea.sflag [#allocation6], %s207
          %s209 = sand.u32 %s68, 1
          %s210 = smul.addr %s209, 32
          %s211 = scalar_lea.vmem [#allocation5], %s210
          %s212 = smul.u32 8, %s28
          %s214 = ssub.s32 512, 512
          %215 = vsyncadd %s208, %s214
          %s216 = smul.addr %s212, 64
          %s217 = scalar_lea.hbm %s1, %s216
          %s218 = sshll.u32 %s211, 4
          %s219 = int_to_ptr.vmem [resolvable:$true] %s218
          %224 = dma.hbm_to_vmem [thread:$0]  %s217, 512, %s219, %s208, 64, 64, 4
        $region24: #{tpu_custom_call.1} parent=15 // pred_fallthru
          _
      $region16: #{tpu_custom_call.1} parent=5 // pred_fallthru
        _
      %p225 = scmp.le.s32.totalorder 1, %s20
      %p226 = scmp.lt.s32.totalorder %s20, 5
      %p227 = pnand %p225, %p226
      %p228 = pneg %p227
      // Predicated region
      $region25: #{tpu_custom_call.1} parent=5 // pred_check
        _
      $region26: #{tpu_custom_call.1} parent=5 // pred_check_branch
        %230 = sbr.rel (%p227) target = $region28
      $region27: #{tpu_custom_call.1} parent=5 // pred_region
        %s231 = ssub.s32 %s20, 1
        %s232 = sand.u32 %s45, 1
        %s233 = scalar_lea.sflag [#allocation3], %s232
        %s234 = sand.u32 %s45, 1
        %s235 = smul.addr %s234, 32
        %s236 = scalar_lea.vmem [#allocation2], %s235
        // Predicated region
        $region29: #{tpu_custom_call.1} parent=27 // pred_check
          %p237 = pneg %p58
        $region30: #{tpu_custom_call.1} parent=27 // pred_check_branch
          %239 = sbr.rel (%p237) target = $region32
        $region31: #{tpu_custom_call.1} parent=27 // pred_region
          %240 = dma.done %s233, 512
        $region32: #{tpu_custom_call.1} parent=27 // pred_fallthru
          _
        %s241 = sand.u32 %s71, 1
        %s242 = scalar_lea.sflag [#allocation6], %s241
        %s243 = sand.u32 %s71, 1
        %s244 = smul.addr %s243, 32
        %s245 = scalar_lea.vmem [#allocation5], %s244
        // Predicated region
        $region33: #{tpu_custom_call.1} parent=27 // pred_check
          %p246 = pneg %p84
        $region34: #{tpu_custom_call.1} parent=27 // pred_check_branch
          %248 = sbr.rel (%p246) target = $region36
        $region35: #{tpu_custom_call.1} parent=27 // pred_region
          %249 = dma.done %s242, 512
        $region36: #{tpu_custom_call.1} parent=27 // pred_fallthru
          _
        %s250 = sand.u32 %s45, 1
        %s251 = scalar_lea.sflag [#allocation3], %s250
        %s252 = sand.u32 %s45, 1
        %s253 = smul.addr %s252, 32
        %s254 = scalar_lea.vmem [#allocation2], %s253
        %p255 = pneg %p58
        %p256 = pneg %p55
        %s257 = sand.u32 %s71, 1
        %s258 = scalar_lea.sflag [#allocation6], %s257
        %s259 = sand.u32 %s71, 1
        %s260 = smul.addr %s259, 32
        %s261 = scalar_lea.vmem [#allocation5], %s260
        %p262 = pneg %p84
        %p263 = pneg %p81
        %p264 = pneg %p110
        %p265 = pneg %p107
        %p266 = scmp.lt.s32.totalorder %s29, 1
        %s267 = scalar_select %p266, %s29, 1
        %s268 = smul.addr %s267, 8
        %s269 = smul.addr %s268, 8
        %s270 = scalar_lea.vmem %s2, %s269
        %p271 = pneg %p136
        %p272 = pneg %p133
        %p273 = scmp.lt.s32.totalorder %s29, 1
        %s274 = scalar_select %p273, %s29, 1
        %s275 = smul.addr %s274, 8
        %s276 = smul.addr %s275, 8
        %s277 = scalar_lea.vmem %s3, %s276
        %p278 = pneg %p164
        %p279 = pneg %p161
        %s280 = sand.u32 %s151, 1
        %s281 = scalar_lea.sflag [#allocation4], %s280
        %s282 = sand.u32 %s151, 1
        %s283 = smul.addr %s282, 8
        %s284 = scalar_lea.vmem [#allocation7], %s283
        %s285 = smul.u32 8, %s29
        %s286 = smul.u32 8, %s30
        %p287 = scmp.lt.s32.totalorder %s29, 1
        %s288 = scalar_select %p287, %s29, 1
        %s289 = smul.addr %s288, 8
        %s290 = smul.addr %s289, 8
        %s291 = scalar_lea.vmem %s2, %s290
        %p292 = scmp.lt.s32.totalorder %s29, 1
        %s293 = scalar_select %p292, %s29, 1
        %s294 = smul.addr %s293, 8
        %s295 = smul.addr %s294, 8
        %s296 = scalar_lea.vmem %s3, %s295
        %v298 = vld [vmem:[%s236] sm:$0xf]
        %v299 = vld [vmem:[%s236 + $0x4] sm:$0xf]
        %v300 = vld [vmem:[%s236 + $0x8] sm:$0xf]
        %v301 = vld [vmem:[%s236 + $0xc] sm:$0xf]
        %v302 = vld [vmem:[%s236 + $0x10] sm:$0xf]
        %v303 = vld [vmem:[%s236 + $0x14] sm:$0xf]
        %v304 = vld [vmem:[%s236 + $0x18] sm:$0xf]
        %v305 = vld [vmem:[%s236 + $0x1c] sm:$0xf]
        %v306 = vld [vmem:[%s245] sm:$0xf]
        %v307 = vld [vmem:[%s245 + $0x4] sm:$0xf]
        %v308 = vld [vmem:[%s245 + $0x8] sm:$0xf]
        %v309 = vld [vmem:[%s245 + $0xc] sm:$0xf]
        %v310 = vld [vmem:[%s245 + $0x10] sm:$0xf]
        %v311 = vld [vmem:[%s245 + $0x14] sm:$0xf]
        %v312 = vld [vmem:[%s245 + $0x18] sm:$0xf]
        %v313 = vld [vmem:[%s245 + $0x1c] sm:$0xf]
        %v322 = vunpack.c.l.b16 %v298
        %v323 = vunpack.c.l.b16 %v299
        %v324 = vunpack.c.l.b16 %v300
        %v325 = vunpack.c.l.b16 %v301
        %v326 = vunpack.c.l.b16 %v302
        %v327 = vunpack.c.l.b16 %v303
        %v328 = vunpack.c.l.b16 %v304
        %v329 = vunpack.c.l.b16 %v305
        %v330 = vpack.c.b16 %v323, %v322
        %v331 = vpack.c.b16 %v325, %v324
        %v332 = vpack.c.b16 %v327, %v326
        %v333 = vpack.c.b16 %v329, %v328
        %v346 = vunpack.c.l.b16 %v306
        %v347 = vunpack.c.l.b16 %v307
        %v348 = vunpack.c.l.b16 %v308
        %v349 = vunpack.c.l.b16 %v309
        %v350 = vunpack.c.l.b16 %v310
        %v351 = vunpack.c.l.b16 %v311
        %v352 = vunpack.c.l.b16 %v312
        %v353 = vunpack.c.l.b16 %v313
        %v354 = vpack.c.b16 %v347, %v346
        %v355 = vpack.c.b16 %v349, %v348
        %v356 = vpack.c.b16 %v351, %v350
        %v357 = vpack.c.b16 %v353, %v352
        %362 = vmatprep.subr.bf16.mxu0 0
        %363 = vmatpush1.bf16.xpose.msra.mxu0 %v354
        %364 = vmatprep.subr.bf16.mxu0 0
        %365 = vmatpush1.bf16.xpose.msra.mxu0 %v355
        %366 = vmatprep.subr.bf16.mxu0 0
        %367 = vmatpush1.bf16.xpose.msra.mxu0 %v356
        %368 = vmatprep.subr.bf16.mxu0 0
        %369 = vmatpush1.bf16.xpose.msra.mxu0 %v357
        %370 = vmatprep.subr.bf16.mxu0 0
        %371 = vmatpush1.bf16.xpose.msra.mxu0 0
        %372 = vmatprep.subr.bf16.mxu0 0
        %373 = vmatpush1.bf16.xpose.msra.mxu0 0
        %374 = vmatprep.subr.bf16.mxu0 0
        %375 = vmatpush1.bf16.xpose.msra.mxu0 0
        %376 = vmatprep.subr.bf16.mxu0 0
        %377 = vmatpush1.bf16.xpose.msra.mxu0 0
        %378 = vmatprep.subr.bf16.mxu0 0
        %379 = vmatpush1.bf16.xpose.msra.mxu0 0
        %380 = vmatprep.subr.bf16.mxu0 0
        %381 = vmatpush1.bf16.xpose.msra.mxu0 0
        %382 = vmatprep.subr.bf16.mxu0 0
        %383 = vmatpush1.bf16.xpose.msra.mxu0 0
        %384 = vmatprep.subr.bf16.mxu0 0
        %385 = vmatpush1.bf16.xpose.msra.mxu0 0
        %386 = vmatprep.subr.bf16.mxu0 0
        %387 = vmatpush1.bf16.xpose.msra.mxu0 0
        %388 = vmatprep.subr.bf16.mxu0 0
        %389 = vmatpush1.bf16.xpose.msra.mxu0 0
        %390 = vmatprep.subr.bf16.mxu0 0
        %391 = vmatpush1.bf16.xpose.msra.mxu0 0
        %392 = vmatprep.subr.bf16.mxu0 0
        %393 = vmatpush1.bf16.xpose.msra.mxu0 0
        %394 = vmatprep.mubr.bf16.mxu0 0
        %395 = vmatmul.mubr.bf16.gmra.mrb[0].mxu0 %v330
        %v396 = vpop.f32.mrb[0].mxu0
        %v397 = vadd.f32 0.0, %v396
        %v398 = vpop.f32.mrb[0].mxu0
        %v399 = vpop.f32.mrb[0].mxu0
        %v400 = vadd.f32 0.0, %v399
        %v401 = vpop.f32.mrb[0].mxu0
        %402 = vmatprep.mubr.bf16.mxu0 0
        %403 = vmatmul.mubr.bf16.gmra.mrb[0].mxu0 %v331
        %v404 = vpop.f32.mrb[0].mxu0
        %v405 = vadd.f32 0.0, %v404
        %v406 = vpop.f32.mrb[0].mxu0
        %v407 = vpop.f32.mrb[0].mxu0
        %v408 = vadd.f32 0.0, %v407
        %v409 = vpop.f32.mrb[0].mxu0
        %410 = vmatprep.mubr.bf16.mxu0 0
        %411 = vmatmul.mubr.bf16.gmra.mrb[0].mxu0 %v332
        %v412 = vpop.f32.mrb[0].mxu0
        %v413 = vadd.f32 0.0, %v412
        %v414 = vpop.f32.mrb[0].mxu0
        %v415 = vpop.f32.mrb[0].mxu0
        %v416 = vadd.f32 0.0, %v415
        %v417 = vpop.f32.mrb[0].mxu0
        %418 = vmatprep.mubr.bf16.mxu0 0
        %419 = vmatmul.mubr.bf16.gmra.mrb[0].mxu0 %v333
        %v420 = vpop.f32.mrb[0].mxu0
        %v421 = vadd.f32 0.0, %v420
        %v422 = vpop.f32.mrb[0].mxu0
        %v423 = vpop.f32.mrb[0].mxu0
        %v424 = vadd.f32 0.0, %v423
        %v425 = vpop.f32.mrb[0].mxu0
        %426 = vdwg.mxu0
        %v427 = vmul.f32 %v397, 1.442695
        %v428 = vpow.pop %v427
        %v429 = vmul.f32 %v400, 1.442695
        %v430 = vpow.pop %v429
        %v431 = vmul.f32 %v405, 1.442695
        %v432 = vpow.pop %v431
        %v433 = vmul.f32 %v408, 1.442695
        %v434 = vpow.pop %v433
        %v435 = vmul.f32 %v413, 1.442695
        %v436 = vpow.pop %v435
        %v437 = vmul.f32 %v416, 1.442695
        %v438 = vpow.pop %v437
        %v439 = vmul.f32 %v421, 1.442695
        %v440 = vpow.pop %v439
        %v441 = vmul.f32 %v424, 1.442695
        %v442 = vpow.pop %v441
        %p443 = scmp.eq.s32.totalorder %s30, 0
        // Predicated region
        $region37: #{tpu_custom_call.1} parent=27 // pred_check
          %p444 = pneg %p443
        $region38: #{tpu_custom_call.1} parent=27 // pred_check_branch
          %446 = sbr.rel (%p444) target = $region40
        $region39: #{tpu_custom_call.1} parent=27 // pred_region
          %vm447 = vcmask 7168
          %448 = vst.msk [vmem:[%s291] sm:$0xff] %vm447, 0.0
          %449 = vst.msk [vmem:[%s291 + $0x8] sm:$0xff] %vm447, 0.0
          %450 = vst.msk [vmem:[%s291 + $0x10] sm:$0xff] %vm447, 0.0
          %451 = vst.msk [vmem:[%s291 + $0x18] sm:$0xff] %vm447, 0.0
          %452 = vst.msk [vmem:[%s291 + $0x20] sm:$0xff] %vm447, 0.0
          %453 = vst.msk [vmem:[%s291 + $0x28] sm:$0xff] %vm447, 0.0
          %454 = vst.msk [vmem:[%s291 + $0x30] sm:$0xff] %vm447, 0.0
          %455 = vst.msk [vmem:[%s291 + $0x38] sm:$0xff] %vm447, 0.0
          %456 = vst.msk [vmem:[%s296] sm:$0xff] %vm447, 0.0
          %457 = vst.msk [vmem:[%s296 + $0x8] sm:$0xff] %vm447, 0.0
          %458 = vst.msk [vmem:[%s296 + $0x10] sm:$0xff] %vm447, 0.0
          %459 = vst.msk [vmem:[%s296 + $0x18] sm:$0xff] %vm447, 0.0
          %460 = vst.msk [vmem:[%s296 + $0x20] sm:$0xff] %vm447, 0.0
          %461 = vst.msk [vmem:[%s296 + $0x28] sm:$0xff] %vm447, 0.0
          %462 = vst.msk [vmem:[%s296 + $0x30] sm:$0xff] %vm447, 0.0
          %463 = vst.msk [vmem:[%s296 + $0x38] sm:$0xff] %vm447, 0.0
        $region40: #{tpu_custom_call.1} parent=27 // pred_fallthru
          _
        %v464 = vld [vmem:[%s291] sm:$0xff]
        %v465 = vld [vmem:[%s291 + $0x8] sm:$0xff]
        %v466 = vld [vmem:[%s291 + $0x10] sm:$0xff]
        %v467 = vld [vmem:[%s291 + $0x18] sm:$0xff]
        %v468 = vld [vmem:[%s291 + $0x20] sm:$0xff]
        %v469 = vld [vmem:[%s291 + $0x28] sm:$0xff]
        %v470 = vld [vmem:[%s291 + $0x30] sm:$0xff]
        %v471 = vld [vmem:[%s291 + $0x38] sm:$0xff]
        %vm472 = vcmask 523264
        %v473 = vsel %vm472, %v428, 0.0
        %474 = vadd.xlane.f32.xlu0 %v473
        %v475 = vpop.xlane.xlu0 %474
        %v476 = vsel %vm472, %v430, 0.0
        %477 = vadd.xlane.f32.xlu0 %v476
        %v478 = vpop.xlane.xlu0 %477
        %v479 = vsel %vm472, %v432, 0.0
        %480 = vadd.xlane.f32.xlu0 %v479
        %v481 = vpop.xlane.xlu0 %480
        %v482 = vsel %vm472, %v434, 0.0
        %483 = vadd.xlane.f32.xlu0 %v482
        %v484 = vpop.xlane.xlu0 %483
        %v485 = vsel %vm472, %v436, 0.0
        %486 = vadd.xlane.f32.xlu0 %v485
        %v487 = vpop.xlane.xlu0 %486
        %v488 = vsel %vm472, %v438, 0.0
        %489 = vadd.xlane.f32.xlu0 %v488
        %v490 = vpop.xlane.xlu0 %489
        %v491 = vsel %vm472, %v440, 0.0
        %492 = vadd.xlane.f32.xlu0 %v491
        %v493 = vpop.xlane.xlu0 %492
        %v494 = vsel %vm472, %v442, 0.0
        %495 = vadd.xlane.f32.xlu0 %v494
        %v496 = vpop.xlane.xlu0 %495
        %v497 = vadd.f32 %v464, %v475
        %v498 = vadd.f32 %v465, %v478
        %v499 = vadd.f32 %v466, %v481
        %v500 = vadd.f32 %v467, %v484
        %v501 = vadd.f32 %v468, %v487
        %v502 = vadd.f32 %v469, %v490
        %v503 = vadd.f32 %v470, %v493
        %v504 = vadd.f32 %v471, %v496
        %vm505 = vcmask 7168
        %506 = vst.msk [vmem:[%s291] sm:$0xff] %vm505, %v497
        %507 = vst.msk [vmem:[%s291 + $0x8] sm:$0xff] %vm505, %v498
        %508 = vst.msk [vmem:[%s291 + $0x10] sm:$0xff] %vm505, %v499
        %509 = vst.msk [vmem:[%s291 + $0x18] sm:$0xff] %vm505, %v500
        %510 = vst.msk [vmem:[%s291 + $0x20] sm:$0xff] %vm505, %v501
        %511 = vst.msk [vmem:[%s291 + $0x28] sm:$0xff] %vm505, %v502
        %512 = vst.msk [vmem:[%s291 + $0x30] sm:$0xff] %vm505, %v503
        %513 = vst.msk [vmem:[%s291 + $0x38] sm:$0xff] %vm505, %v504
        %v514 = vadd.f32 %v473, %v476
        %v515 = vadd.f32 %v514, %v479
        %v516 = vadd.f32 %v515, %v482
        %v517 = vadd.f32 %v516, %v485
        %v518 = vadd.f32 %v517, %v488
        %v519 = vadd.f32 %v518, %v491
        %v520 = vadd.f32 %v519, %v494
        %521 = vst.msk [vmem:[%s284] sm:$0xff] %vm472, %v520
        %p522 = scmp.eq.s32.totalorder %s29, %s30
        // Predicated region
        $region41: #{tpu_custom_call.1} parent=27 // pred_check
          %p523 = pneg %p522
        $region42: #{tpu_custom_call.1} parent=27 // pred_check_branch
          %525 = sbr.rel (%p523) target = $region44
        $region43: #{tpu_custom_call.1} parent=27 // pred_region
          %v526 = vlaneseq
          %v527 = vshrl.u32 %v526, 7
          %v528 = vadd.s32 %v527, 8
          %v529 = vadd.s32 %v527, 16
          %v530 = vadd.s32 %v527, 24
          %v531 = vadd.s32 %v527, 32
          %v532 = vadd.s32 %v527, 40
          %v533 = vadd.s32 %v527, 48
          %v534 = vadd.s32 %v527, 56
          %v535 = vlaneseq
          %v536 = vand.u32 %v535, 127
          %vm537 = vcmp.eq.s32.totalorder %v527, %v536
          %vm538 = vcmp.eq.s32.totalorder %v528, %v536
          %vm539 = vcmp.eq.s32.totalorder %v529, %v536
          %vm540 = vcmp.eq.s32.totalorder %v530, %v536
          %vm541 = vcmp.eq.s32.totalorder %v531, %v536
          %vm542 = vcmp.eq.s32.totalorder %v532, %v536
          %vm543 = vcmp.eq.s32.totalorder %v533, %v536
          %vm544 = vcmp.eq.s32.totalorder %v534, %v536
          %v545 = vsel %vm537, %v397, 0.0
          %v546 = vsel %vm538, %v400, 0.0
          %v547 = vsel %vm539, %v405, 0.0
          %v548 = vsel %vm540, %v408, 0.0
          %v549 = vsel %vm541, %v413, 0.0
          %v550 = vsel %vm542, %v416, 0.0
          %v551 = vsel %vm543, %v421, 0.0
          %v552 = vsel %vm544, %v424, 0.0
          %v553 = vsel %vm472, %v545, 0.0
          %554 = vadd.xlane.f32.xlu0 %v553
          %v555 = vpop.xlane.xlu0 %554
          %v556 = vsel %vm472, %v546, 0.0
          %557 = vadd.xlane.f32.xlu0 %v556
          %v558 = vpop.xlane.xlu0 %557
          %v559 = vsel %vm472, %v547, 0.0
          %560 = vadd.xlane.f32.xlu0 %v559
          %v561 = vpop.xlane.xlu0 %560
          %v562 = vsel %vm472, %v548, 0.0
          %563 = vadd.xlane.f32.xlu0 %v562
          %v564 = vpop.xlane.xlu0 %563
          %v565 = vsel %vm472, %v549, 0.0
          %566 = vadd.xlane.f32.xlu0 %v565
          %v567 = vpop.xlane.xlu0 %566
          %v568 = vsel %vm472, %v550, 0.0
          %569 = vadd.xlane.f32.xlu0 %v568
          %v570 = vpop.xlane.xlu0 %569
          %v571 = vsel %vm472, %v551, 0.0
          %572 = vadd.xlane.f32.xlu0 %v571
          %v573 = vpop.xlane.xlu0 %572
          %v574 = vsel %vm472, %v552, 0.0
          %575 = vadd.xlane.f32.xlu0 %v574
          %v576 = vpop.xlane.xlu0 %575
          %577 = vst.msk [vmem:[%s296] sm:$0xff] %vm505, %v555
          %578 = vst.msk [vmem:[%s296 + $0x8] sm:$0xff] %vm505, %v558
          %579 = vst.msk [vmem:[%s296 + $0x10] sm:$0xff] %vm505, %v561
          %580 = vst.msk [vmem:[%s296 + $0x18] sm:$0xff] %vm505, %v564
          %581 = vst.msk [vmem:[%s296 + $0x20] sm:$0xff] %vm505, %v567
          %582 = vst.msk [vmem:[%s296 + $0x28] sm:$0xff] %vm505, %v570
          %583 = vst.msk [vmem:[%s296 + $0x30] sm:$0xff] %vm505, %v573
          %584 = vst.msk [vmem:[%s296 + $0x38] sm:$0xff] %vm505, %v576
        $region44: #{tpu_custom_call.1} parent=27 // pred_fallthru
          _
        %p585 = scmp.lt.s32.totalorder %s29, 1
        %s586 = scalar_select %p585, %s29, 1
        %s587 = smul.addr %s586, 8
        %s588 = smul.addr %s587, 8
        %s589 = scalar_lea.vmem %s2, %s588
        %p590 = scmp.lt.s32.totalorder %s29, 1
        %s591 = scalar_select %p590, %s29, 1
        %s592 = smul.addr %s591, 8
        %s593 = smul.addr %s592, 8
        %s594 = scalar_lea.vmem %s3, %s593
        %s595 = sand.u32 %s151, 1
        %s596 = scalar_lea.sflag [#allocation4], %s595
        %s597 = sand.u32 %s151, 1
        %s598 = smul.addr %s597, 8
        %s599 = scalar_lea.vmem [#allocation7], %s598
        // Predicated region
        $region45: #{tpu_custom_call.1} parent=27 // pred_check
          %p600 = pneg %p107
        $region46: #{tpu_custom_call.1} parent=27 // pred_check_branch
          %602 = sbr.rel (%p600) target = $region48
        $region47: #{tpu_custom_call.1} parent=27 // pred_region
          _
        $region48: #{tpu_custom_call.1} parent=27 // pred_fallthru
          _
        // Predicated region
        $region49: #{tpu_custom_call.1} parent=27 // pred_check
          %p603 = pneg %p133
        $region50: #{tpu_custom_call.1} parent=27 // pred_check_branch
          %605 = sbr.rel (%p603) target = $region52
        $region51: #{tpu_custom_call.1} parent=27 // pred_region
          _
        $region52: #{tpu_custom_call.1} parent=27 // pred_fallthru
          _
        // Predicated region
        $region53: #{tpu_custom_call.1} parent=27 // pred_check
          %p606 = pneg %p161
        $region54: #{tpu_custom_call.1} parent=27 // pred_check_branch
          %608 = sbr.rel (%p606) target = $region56
        $region55: #{tpu_custom_call.1} parent=27 // pred_region
          %s610 = ssub.s32 128, 128
          %611 = vsyncadd %s596, %s610
          %s612 = smul.addr %s29, 2
          %s613 = sadd.s32 %s30, %s612
          %s614 = smul.addr %s613, 128
          %s615 = scalar_lea.hbm %s4, %s614
          %s617 = sshll.u32 %s599, 4
          %s618 = int_to_ptr.vmem [resolvable:$true] %s617
          %620 = dma.vmem_to_hbm [thread:$0]  %s618, 128, %s615, %s596
        $region56: #{tpu_custom_call.1} parent=27 // pred_fallthru
          _
      $region28: #{tpu_custom_call.1} parent=5 // pred_fallthru
        _
      %p621 = scmp.le.s32.totalorder 2, %s20
      // Predicated region
      $region57: #{tpu_custom_call.1} parent=5 // pred_check
        %p622 = pneg %p621
      $region58: #{tpu_custom_call.1} parent=5 // pred_check_branch
        %624 = sbr.rel (%p622) target = $region60
      $region59: #{tpu_custom_call.1} parent=5 // pred_region
        %s625 = ssub.s32 %s20, 2
        // Predicated region
        $region61: #{tpu_custom_call.1} parent=59 // pred_check
          %p626 = pneg %p113
        $region62: #{tpu_custom_call.1} parent=59 // pred_check_branch
          %628 = sbr.rel (%p626) target = $region64
        $region63: #{tpu_custom_call.1} parent=59 // pred_region
          %p629 = scmp.lt.s32.totalorder %s31, 1
          %s630 = scalar_select %p629, %s31, 1
          %s631 = smul.addr %s630, 8
          %s632 = smul.addr %s631, 8
          %s633 = scalar_lea.vmem %s2, %s632
        $region64: #{tpu_custom_call.1} parent=59 // pred_fallthru
          _
        // Predicated region
        $region65: #{tpu_custom_call.1} parent=59 // pred_check
          %p634 = pneg %p139
        $region66: #{tpu_custom_call.1} parent=59 // pred_check_branch
          %636 = sbr.rel (%p634) target = $region68
        $region67: #{tpu_custom_call.1} parent=59 // pred_region
          %p637 = scmp.lt.s32.totalorder %s31, 1
          %s638 = scalar_select %p637, %s31, 1
          %s639 = smul.addr %s638, 8
          %s640 = smul.addr %s639, 8
          %s641 = scalar_lea.vmem %s3, %s640
        $region68: #{tpu_custom_call.1} parent=59 // pred_fallthru
          _
        // Predicated region
        $region69: #{tpu_custom_call.1} parent=59 // pred_check
          %p642 = pneg %p167
        $region70: #{tpu_custom_call.1} parent=59 // pred_check_branch
          %644 = sbr.rel (%p642) target = $region72
        $region71: #{tpu_custom_call.1} parent=59 // pred_region
          %s645 = sand.u32 %s152, 1
          %s646 = scalar_lea.sflag [#allocation4], %s645
          %s647 = sand.u32 %s152, 1
          %s648 = smul.addr %s647, 8
          %s649 = scalar_lea.vmem [#allocation7], %s648
          %650 = dma.done %s646, 128
        $region72: #{tpu_custom_call.1} parent=59 // pred_fallthru
          _
      $region60: #{tpu_custom_call.1} parent=5 // pred_fallthru
        _
    $region6: #{tpu_custom_call.1} parent=1 // loop_footer
      %s24 = sadd.s32 1, %s20
    $region7: #{tpu_custom_call.1} parent=1 // loop_footer_branch
      %19 = sbr.rel target = $region3
    $region8: #{tpu_custom_call.1} parent=1 // loop_exit
      _
    %651 = vsyncpa [#allocation3], 1
    %s652 = scalar_lea.sflag [#allocation3], 1
    %653 = vsyncpa %s652, 1
    %654 = vsyncpa [#allocation6], 1
    %s655 = scalar_lea.sflag [#allocation6], 1
    %656 = vsyncpa %s655, 1
    %657 = vsyncpa [#allocation4], 1
    %s658 = scalar_lea.sflag [#allocation4], 1
    %659 = vsyncpa %s658, 1

</llo_original>
